<compile_context>
chip_gen: v7x
topology: tpu7x:2x2x1
jax: 0.10.0
libtpu: 0.0.40
codegen_flags: <defaults>
</compile_context>

<pallas_src>
import jax
import jax.numpy as jnp
from jax.experimental import pallas as pl
from jax.experimental.pallas import tpu as pltpu


def _mlp_kernel(x_ref, w1_ref, b1_ref, w2_ref, b2_ref, w3_ref, b3_ref, o_ref):
    # f32 tile read from HBM, bf16 cast in-register for the MXU.
    x = x_ref[...].astype(jnp.bfloat16)

    # Layer 1: Linear(Cin -> 128) + ReLU  (dropout = identity at inference).
    h1 = jnp.dot(x, w1_ref[...], preferred_element_type=jnp.float32)
    h1 = jnp.maximum(h1 + b1_ref[...], 0.0).astype(jnp.bfloat16)

    # Layer 2: Linear(128 -> 64). torchvision.ops.MLP applies NO activation on
    # its final hidden layer (only dropout, identity at inference).
    h2 = jnp.dot(h1, w2_ref[...], preferred_element_type=jnp.float32)
    h2 = (h2 + b2_ref[...]).astype(jnp.bfloat16)

    # Head: Linear(64 -> numClasses). Narrow (sub-128) masked store; far fewer
    # HBM bytes than a lane-dense 128-wide padded stream for this HBM-bound op.
    out = jnp.dot(h2, w3_ref[...], preferred_element_type=jnp.float32)
    o_ref[...] = (out + b3_ref[...]).astype(o_ref.dtype)


def _round_up(n, m):
    return ((n + m - 1) // m) * m


def prepare_params(params):
    """One-time weight prep (hoisted out of the per-forward path):
    bf16 matmul operands, f32 biases for the epilogue."""
    return {
        "w1": params["w1"].astype(jnp.bfloat16),
        "w2": params["w2"].astype(jnp.bfloat16),
        "w3": params["w3"].astype(jnp.bfloat16),
        "b1": params["b1"].astype(jnp.float32),
        "b2": params["b2"].astype(jnp.float32),
        "b3": params["b3"].astype(jnp.float32),
    }


def simples_mlp_forward(x, prepared, *, batch_tile=2048):
    """x: [B, Cin] float32. `prepared` = prepare_params(params); weights are
    stored as [in, out] (transposed vs. PyTorch's [out, in])."""
    w1, b1 = prepared["w1"], prepared["b1"]
    w2, b2 = prepared["w2"], prepared["b2"]
    w3, b3 = prepared["w3"], prepared["b3"]

    B, Cin = x.shape
    H1 = w1.shape[1]
    H2 = w2.shape[1]
    num_classes = w3.shape[1]

    # Batch tiling: large tiles to amortize the ~0.35us per-grid-step overhead,
    # but keep >= 2 grid steps when B allows so v7x's two TensorCores both get
    # a share of the "parallel" batch axis. No jnp.pad: Pallas ceil-divides the
    # grid and masks the ragged last block's writeback.
    n_steps = pl.cdiv(B, batch_tile)
    if B >= 64:
        n_steps = max(n_steps, 2)
    TB = min(_round_up(B, 8), _round_up(pl.cdiv(B, n_steps), 8))
    grid = (pl.cdiv(B, TB),)

    def const_spec(arr):
        ndim = arr.ndim
        return pl.BlockSpec(arr.shape, lambda i, _n=ndim: (0,) * _n)

    flops = 2 * B * (Cin * H1 + H1 * H2 + H2 * num_classes)
    bytes_accessed = (
        x.size * x.dtype.itemsize
        + sum(a.size * a.dtype.itemsize for a in (w1, w2, w3, b1, b2, b3))
        + B * num_classes * 4
    )

    return pl.pallas_call(
        _mlp_kernel,
        out_shape=jax.ShapeDtypeStruct((B, num_classes), jnp.float32),
        grid=grid,
        in_specs=[
            pl.BlockSpec((TB, Cin), lambda i: (i, 0)),  # x tile: pipelined DMA
            const_spec(w1), const_spec(b1),             # weights: VMEM-resident
            const_spec(w2), const_spec(b2),             # (constant index maps)
            const_spec(w3), const_spec(b3),
        ],
        out_specs=pl.BlockSpec((TB, num_classes), lambda i: (i, 0)),
        compiler_params=pltpu.CompilerParams(
            dimension_semantics=("parallel",),
        ),
        cost_estimate=pl.CostEstimate(
            flops=flops, transcendentals=0, bytes_accessed=bytes_accessed),
    )(x, w1, b1, w2, b2, w3, b3)


def init_params(key, input_channels, num_classes, hidden_channels=(128, 64)):
    """Deterministic init mimicking nn.Linear default (uniform +-1/sqrt(fan_in)).
    Weights stored as [in, out] (transposed vs. PyTorch's [out, in])."""
    dims = [input_channels, *hidden_channels, num_classes]
    params = {}
    for i in range(3):
        fan_in, fan_out = dims[i], dims[i + 1]
        key, kw, kb = jax.random.split(key, 3)
        bound = 1.0 / (fan_in ** 0.5)
        params[f"w{i+1}"] = jax.random.uniform(
            kw, (fan_in, fan_out), jnp.float32, -bound, bound)
        params[f"b{i+1}"] = jax.random.uniform(
            kb, (1, fan_out), jnp.float32, -bound, bound)
    return params


if __name__ == "__main__":
    key = jax.random.PRNGKey(0)
    key, kx = jax.random.split(key)

    batch = 8
    input_channels = 32
    num_classes = 10

    x = jax.random.normal(kx, (batch, input_channels), jnp.float32)
    params = init_params(key, input_channels, num_classes)
    prepared = prepare_params(params)   # one-time weight prep (bf16 casts)

    out = simples_mlp_forward(x, prepared)
    jax.block_until_ready(out)

    # Pure-JAX f32 reference (kernel uses bf16 matmul operands -> loose tol).
    h = jnp.maximum(x @ params["w1"] + params["b1"], 0.0)
    h = h @ params["w2"] + params["b2"]          # no activation on last hidden layer
    ref = h @ params["w3"] + params["b3"]
    assert out.shape == (batch, num_classes)
    assert jnp.allclose(out, ref, atol=3e-2, rtol=3e-2), (
        f"max abs err {jnp.max(jnp.abs(out - ref))}")

    print("KERNEL_OK")
</pallas_src>

<mosaic_0001>
module attributes {stable_mosaic.version = 11 : i64} {
  func.func @_mlp_kernel(%arg0: i32, %arg1: memref<8x32xf32, #tpu.memory_space<vmem>>, %arg2: memref<32x128xbf16, #tpu.memory_space<vmem>>, %arg3: memref<1x128xf32, #tpu.memory_space<vmem>>, %arg4: memref<128x64xbf16, #tpu.memory_space<vmem>>, %arg5: memref<1x64xf32, #tpu.memory_space<vmem>>, %arg6: memref<64x10xbf16, #tpu.memory_space<vmem>>, %arg7: memref<1x10xf32, #tpu.memory_space<vmem>>, %arg8: memref<8x10xf32, #tpu.memory_space<vmem>>) attributes {dimension_semantics = [#tpu.dimension_semantics<parallel>], iteration_bounds = array<i64: 1>, scalar_prefetch = 0 : i64, scratch_operands = 0 : i64, tpu.core_type = #tpu.core_type<tc>, window_params = [{transform_indices = @transform_0, window_bounds = array<i64: 8, 32>}, {pipeline_mode = #tpu.pipeline_mode<synchronous>, transform_indices = @transform_1, window_bounds = array<i64: 32, 128>}, {pipeline_mode = #tpu.pipeline_mode<synchronous>, transform_indices = @transform_2, window_bounds = array<i64: 1, 128>}, {pipeline_mode = #tpu.pipeline_mode<synchronous>, transform_indices = @transform_3, window_bounds = array<i64: 128, 64>}, {pipeline_mode = #tpu.pipeline_mode<synchronous>, transform_indices = @transform_4, window_bounds = array<i64: 1, 64>}, {pipeline_mode = #tpu.pipeline_mode<synchronous>, transform_indices = @transform_5, window_bounds = array<i64: 64, 10>}, {pipeline_mode = #tpu.pipeline_mode<synchronous>, transform_indices = @transform_6, window_bounds = array<i64: 1, 10>}, {transform_indices = @transform_7, window_bounds = array<i64: 8, 10>}]} {
    %c0 = arith.constant 0 : index
    %c0_0 = arith.constant 0 : index
    %0 = vector.load %arg1[%c0, %c0_0] : memref<8x32xf32, #tpu.memory_space<vmem>>, vector<8x32xf32>
    %1 = arith.truncf %0 : vector<8x32xf32> to vector<8x32xbf16>
    %c0_1 = arith.constant 0 : index
    %c0_2 = arith.constant 0 : index
    %2 = vector.load %arg2[%c0_1, %c0_2] : memref<32x128xbf16, #tpu.memory_space<vmem>>, vector<32x128xbf16>
    %cst = arith.constant dense<0.000000e+00> : vector<8x128xf32>
    %3 = tpu.matmul %1, %2, %cst {dimension_numbers = #tpu.dot_dimension_numbers<[1], [0], [0], [1], [0, 0, 1, 1], [], []>} : vector<8x32xbf16>, vector<32x128xbf16>, vector<8x128xf32> -> vector<8x128xf32>
    %c0_3 = arith.constant 0 : index
    %c0_4 = arith.constant 0 : index
    %4 = vector.load %arg3[%c0_3, %c0_4] : memref<1x128xf32, #tpu.memory_space<vmem>>, vector<1x128xf32>
    %5 = vector.broadcast %4 : vector<1x128xf32> to vector<8x128xf32>
    %6 = arith.addf %3, %5 : vector<8x128xf32>
    %cst_5 = arith.constant 0.000000e+00 : f32
    %7 = vector.broadcast %cst_5 : f32 to vector<8x128xf32>
    %8 = arith.maximumf %6, %7 : vector<8x128xf32>
    %9 = arith.truncf %8 : vector<8x128xf32> to vector<8x128xbf16>
    %c0_6 = arith.constant 0 : index
    %c0_7 = arith.constant 0 : index
    %10 = vector.load %arg4[%c0_6, %c0_7] : memref<128x64xbf16, #tpu.memory_space<vmem>>, vector<128x64xbf16>
    %cst_8 = arith.constant dense<0.000000e+00> : vector<8x64xf32>
    %11 = tpu.matmul %9, %10, %cst_8 {dimension_numbers = #tpu.dot_dimension_numbers<[1], [0], [0], [1], [0, 0, 1, 1], [], []>} : vector<8x128xbf16>, vector<128x64xbf16>, vector<8x64xf32> -> vector<8x64xf32>
    %c0_9 = arith.constant 0 : index
    %c0_10 = arith.constant 0 : index
    %12 = vector.load %arg5[%c0_9, %c0_10] : memref<1x64xf32, #tpu.memory_space<vmem>>, vector<1x64xf32>
    %13 = vector.broadcast %12 : vector<1x64xf32> to vector<8x64xf32>
    %14 = arith.addf %11, %13 : vector<8x64xf32>
    %15 = arith.truncf %14 : vector<8x64xf32> to vector<8x64xbf16>
    %c0_11 = arith.constant 0 : index
    %c0_12 = arith.constant 0 : index
    %16 = vector.load %arg6[%c0_11, %c0_12] : memref<64x10xbf16, #tpu.memory_space<vmem>>, vector<64x10xbf16>
    %cst_13 = arith.constant dense<0.000000e+00> : vector<8x10xf32>
    %17 = tpu.matmul %15, %16, %cst_13 {dimension_numbers = #tpu.dot_dimension_numbers<[1], [0], [0], [1], [0, 0, 1, 1], [], []>} : vector<8x64xbf16>, vector<64x10xbf16>, vector<8x10xf32> -> vector<8x10xf32>
    %c0_14 = arith.constant 0 : index
    %c0_15 = arith.constant 0 : index
    %18 = vector.load %arg7[%c0_14, %c0_15] : memref<1x10xf32, #tpu.memory_space<vmem>>, vector<1x10xf32>
    %19 = vector.broadcast %18 : vector<1x10xf32> to vector<8x10xf32>
    %20 = arith.addf %17, %19 : vector<8x10xf32>
    %c0_16 = arith.constant 0 : index
    %c0_17 = arith.constant 0 : index
    %21 = vector.load %arg8[%c0_16, %c0_17] : memref<8x10xf32, #tpu.memory_space<vmem>>, vector<8x10xf32>
    tpu.vector_store %arg8[%c0_16, %c0_17], %20 {strides = array<i32>} : memref<8x10xf32, #tpu.memory_space<vmem>>, vector<8x10xf32>,
    return
  }
  func.func @transform_0(%arg0: i32) -> (i32, i32) {
    %c0_i32 = arith.constant 0 : i32
    %c0_i32_0 = arith.constant 0 : i32
    return %arg0, %c0_i32 : i32, i32
  }
  func.func @transform_1(%arg0: i32) -> (i32, i32) {
    %c0_i32 = arith.constant 0 : i32
    %c0_i32_0 = arith.constant 0 : i32
    %c0_i32_1 = arith.constant 0 : i32
    return %c0_i32, %c0_i32_0 : i32, i32
  }
  func.func @transform_2(%arg0: i32) -> (i32, i32) {
    %c0_i32 = arith.constant 0 : i32
    %c0_i32_0 = arith.constant 0 : i32
    %c0_i32_1 = arith.constant 0 : i32
    return %c0_i32, %c0_i32_0 : i32, i32
  }
  func.func @transform_3(%arg0: i32) -> (i32, i32) {
    %c0_i32 = arith.constant 0 : i32
    %c0_i32_0 = arith.constant 0 : i32
    %c0_i32_1 = arith.constant 0 : i32
    return %c0_i32, %c0_i32_0 : i32, i32
  }
  func.func @transform_4(%arg0: i32) -> (i32, i32) {
    %c0_i32 = arith.constant 0 : i32
    %c0_i32_0 = arith.constant 0 : i32
    %c0_i32_1 = arith.constant 0 : i32
    return %c0_i32, %c0_i32_0 : i32, i32
  }
  func.func @transform_5(%arg0: i32) -> (i32, i32) {
    %c0_i32 = arith.constant 0 : i32
    %c0_i32_0 = arith.constant 0 : i32
    %c0_i32_1 = arith.constant 0 : i32
    return %c0_i32, %c0_i32_0 : i32, i32
  }
  func.func @transform_6(%arg0: i32) -> (i32, i32) {
    %c0_i32 = arith.constant 0 : i32
    %c0_i32_0 = arith.constant 0 : i32
    %c0_i32_1 = arith.constant 0 : i32
    return %c0_i32, %c0_i32_0 : i32, i32
  }
  func.func @transform_7(%arg0: i32) -> (i32, i32) {
    %c0_i32 = arith.constant 0 : i32
    %c0_i32_0 = arith.constant 0 : i32
    return %arg0, %c0_i32 : i32, i32
  }
}

</mosaic_0001>

<llo_original>
// kernel: tpu_custom_call.1
$region0: #{tpu_custom_call.1}
  #allocation0 [shape = 'u32[]', space=smem, size = 0x4, offset = 0x4, fixed_abs, tag = 'smem constant byte address 0x4 - core index']
  #allocation1 [shape = 'u32[144,128]{1,0:T(1,128)}', space=vmem, size = 0x12000, scoped, tag = 'internal scratch']
  %s0 = inlined_call_operand.vmem [shape: f32[8,32], index: 0, kind: input, shape index: {}]
  %s1 = inlined_call_operand.vmem [shape: bf16[32,128], index: 1, kind: input, shape index: {}]
  %s2 = inlined_call_operand.vmem [shape: f32[1,128], index: 2, kind: input, shape index: {}]
  %s3 = inlined_call_operand.vmem [shape: bf16[128,64], index: 3, kind: input, shape index: {}]
  %s4 = inlined_call_operand.vmem [shape: f32[1,64], index: 4, kind: input, shape index: {}]
  %s5 = inlined_call_operand.vmem [shape: bf16[64,10], index: 5, kind: input, shape index: {}]
  %s6 = inlined_call_operand.vmem [shape: f32[1,10], index: 6, kind: input, shape index: {}]
  %s7 = inlined_call_operand.hbm [shape: f32[8,10], index: 7, kind: output, shape index: {}]
  %s8 = sld [smem:[#allocation0]]
  $region38: #{tpu_custom_call.1} parent=0
    _
  %s10 = ssub.s32 1, %s8
  %s11 = scalar_select 0, %s10, %s8
  $region1: #{tpu_custom_call.1} parent=0
    #allocation2 [shape = 'u8[4096]{0}', space=vmem, size = 0x1000, scoped, tag = 'output window, operand 0, single buffered']
    #allocation3 [shape = 's32[1]{0}', space=sflag, size = 0x4, scoped, tag = 'scoped memory for tpu_custom_call.1']
    %12 = vsyncpa [#allocation3], 0
    // Predicated region
    $region2: #{tpu_custom_call.1} parent=1 // pred_check
      _
    $region3: #{tpu_custom_call.1} parent=1 // pred_check_branch
      %14 = sbr.rel (0) target = $region5
    $region4: #{tpu_custom_call.1} parent=1 // pred_region
      _
    $region5: #{tpu_custom_call.1} parent=1 // pred_fallthru
      _
    // Predicated region
    $region6: #{tpu_custom_call.1} parent=1 // pred_check
      _
    $region7: #{tpu_custom_call.1} parent=1 // pred_check_branch
      %16 = sbr.rel (0) target = $region9
    $region8: #{tpu_custom_call.1} parent=1 // pred_region
      _
    $region9: #{tpu_custom_call.1} parent=1 // pred_fallthru
      _
    // Predicated region
    $region10: #{tpu_custom_call.1} parent=1 // pred_check
      _
    $region11: #{tpu_custom_call.1} parent=1 // pred_check_branch
      %18 = sbr.rel (0) target = $region13
    $region12: #{tpu_custom_call.1} parent=1 // pred_region
      _
    $region13: #{tpu_custom_call.1} parent=1 // pred_fallthru
      _
    // Predicated region
    $region14: #{tpu_custom_call.1} parent=1 // pred_check
      _
    $region15: #{tpu_custom_call.1} parent=1 // pred_check_branch
      %20 = sbr.rel (0) target = $region17
    $region16: #{tpu_custom_call.1} parent=1 // pred_region
      _
    $region17: #{tpu_custom_call.1} parent=1 // pred_fallthru
      _
    // Predicated region
    $region18: #{tpu_custom_call.1} parent=1 // pred_check
      _
    $region19: #{tpu_custom_call.1} parent=1 // pred_check_branch
      %22 = sbr.rel (0) target = $region21
    $region20: #{tpu_custom_call.1} parent=1 // pred_region
      _
    $region21: #{tpu_custom_call.1} parent=1 // pred_fallthru
      _
    // Predicated region
    $region22: #{tpu_custom_call.1} parent=1 // pred_check
      _
    $region23: #{tpu_custom_call.1} parent=1 // pred_check_branch
      %24 = sbr.rel (0) target = $region25
    $region24: #{tpu_custom_call.1} parent=1 // pred_region
      _
    $region25: #{tpu_custom_call.1} parent=1 // pred_fallthru
      _
    // Predicated region
    $region26: #{tpu_custom_call.1} parent=1 // pred_check
      _
    $region27: #{tpu_custom_call.1} parent=1 // pred_check_branch
      %26 = sbr.rel (0) target = $region29
    $region28: #{tpu_custom_call.1} parent=1 // pred_region
      _
    $region29: #{tpu_custom_call.1} parent=1 // pred_fallthru
      _
    %v28 = vld [vmem:[%s0] sm:$0xff]
    %v29 = vpack.c.bf16 %v28, %v28
    %v30 = vld [vmem:[%s1] sm:$0xf]
    %v31 = vld [vmem:[%s1 + $0x4] sm:$0xf]
    %v32 = vld [vmem:[%s1 + $0x8] sm:$0xf]
    %v33 = vld [vmem:[%s1 + $0xc] sm:$0xf]
    %v34 = vld [vmem:[%s2] sm:$0x1]
    %v36 = vlaneseq
    %v37 = vshrl.u32 %v36, 7
    %v38 = vsub.s32 0, %v37
    %v39 = vrot.slane %v34, %v38
    %v45 = vunpack.c.l.b16 %v30
    %v46 = vunpack.c.l.b16 %v31
    %v47 = vunpack.c.l.b16 %v32
    %v48 = vunpack.c.l.b16 %v33
    %v49 = vpack.c.b16 %v46, %v45
    %v50 = vpack.c.b16 %v48, %v47
    %vm53 = vcmask 261120
    %v55 = vsel %vm53, %v29, 0
    %57 = vmatprep.subr.bf16.mxu0 0
    %58 = vmatpush1.bf16.msra.mxu0 %v49
    %59 = vmatprep.subr.bf16.mxu0 0
    %60 = vmatpush1.bf16.msra.mxu0 %v50
    %61 = vmatprep.subr.bf16.mxu0 0
    %62 = vmatpush1.bf16.msra.mxu0 0
    %63 = vmatprep.subr.bf16.mxu0 0
    %64 = vmatpush1.bf16.msra.mxu0 0
    %65 = vmatprep.subr.bf16.mxu0 0
    %66 = vmatpush1.bf16.msra.mxu0 0
    %67 = vmatprep.subr.bf16.mxu0 0
    %68 = vmatpush1.bf16.msra.mxu0 0
    %69 = vmatprep.subr.bf16.mxu0 0
    %70 = vmatpush1.bf16.msra.mxu0 0
    %71 = vmatprep.subr.bf16.mxu0 0
    %72 = vmatpush1.bf16.msra.mxu0 0
    %73 = vmatprep.subr.bf16.mxu0 0
    %74 = vmatpush1.bf16.msra.mxu0 0
    %75 = vmatprep.subr.bf16.mxu0 0
    %76 = vmatpush1.bf16.msra.mxu0 0
    %77 = vmatprep.subr.bf16.mxu0 0
    %78 = vmatpush1.bf16.msra.mxu0 0
    %79 = vmatprep.subr.bf16.mxu0 0
    %80 = vmatpush1.bf16.msra.mxu0 0
    %81 = vmatprep.subr.bf16.mxu0 0
    %82 = vmatpush1.bf16.msra.mxu0 0
    %83 = vmatprep.subr.bf16.mxu0 0
    %84 = vmatpush1.bf16.msra.mxu0 0
    %85 = vmatprep.subr.bf16.mxu0 0
    %86 = vmatpush1.bf16.msra.mxu0 0
    %87 = vmatprep.subr.bf16.mxu0 0
    %88 = vmatpush1.bf16.msra.mxu0 0
    %89 = vmatprep.mubr.bf16.mxu0 0
    %90 = vmatmul.mubr.bf16.gmra.mrb[0].mxu0 %v55
    %v91 = vpop.f32.mrb[0].mxu0
    %v92 = vadd.f32 %v39, %v91
    %v93 = vpop.f32.mrb[0].mxu0
    %v94 = vpop.f32.mrb[0].mxu0
    %v95 = vpop.f32.mrb[0].mxu0
    %96 = vdwg.mxu0
    %v97 = vmax.f32 %v92, 0.0
    %v98 = vpack.c.bf16 %v97, %v97
    %v99 = vld [vmem:[%s3] sm:$0xf]
    %v100 = vld [vmem:[%s3 + $0x4] sm:$0xf]
    %v101 = vld [vmem:[%s3 + $0x8] sm:$0xf]
    %v102 = vld [vmem:[%s3 + $0xc] sm:$0xf]
    %v103 = vld [vmem:[%s3 + $0x10] sm:$0xf]
    %v104 = vld [vmem:[%s3 + $0x14] sm:$0xf]
    %v105 = vld [vmem:[%s3 + $0x18] sm:$0xf]
    %v106 = vld [vmem:[%s3 + $0x1c] sm:$0xf]
    %v107 = vld [vmem:[%s3 + $0x20] sm:$0xf]
    %v108 = vld [vmem:[%s3 + $0x24] sm:$0xf]
    %v109 = vld [vmem:[%s3 + $0x28] sm:$0xf]
    %v110 = vld [vmem:[%s3 + $0x2c] sm:$0xf]
    %v111 = vld [vmem:[%s3 + $0x30] sm:$0xf]
    %v112 = vld [vmem:[%s3 + $0x34] sm:$0xf]
    %v113 = vld [vmem:[%s3 + $0x38] sm:$0xf]
    %v114 = vld [vmem:[%s3 + $0x3c] sm:$0xf]
    %v115 = vld [vmem:[%s4] sm:$0x1]
    %v117 = vlaneseq
    %v118 = vshrl.u32 %v117, 7
    %v119 = vsub.s32 0, %v118
    %v120 = vrot.slane %v115, %v119
    %v138 = vunpack.c.l.b16 %v99
    %v139 = vunpack.c.l.b16 %v100
    %v140 = vunpack.c.l.b16 %v101
    %v141 = vunpack.c.l.b16 %v102
    %v142 = vunpack.c.l.b16 %v103
    %v143 = vunpack.c.l.b16 %v104
    %v144 = vunpack.c.l.b16 %v105
    %v145 = vunpack.c.l.b16 %v106
    %v146 = vunpack.c.l.b16 %v107
    %v147 = vunpack.c.l.b16 %v108
    %v148 = vunpack.c.l.b16 %v109
    %v149 = vunpack.c.l.b16 %v110
    %v150 = vunpack.c.l.b16 %v111
    %v151 = vunpack.c.l.b16 %v112
    %v152 = vunpack.c.l.b16 %v113
    %v153 = vunpack.c.l.b16 %v114
    %v154 = vpack.c.b16 %v139, %v138
    %v155 = vpack.c.b16 %v141, %v140
    %v156 = vpack.c.b16 %v143, %v142
    %v157 = vpack.c.b16 %v145, %v144
    %v158 = vpack.c.b16 %v147, %v146
    %v159 = vpack.c.b16 %v149, %v148
    %v160 = vpack.c.b16 %v151, %v150
    %v161 = vpack.c.b16 %v153, %v152
    %170 = vmatprep.subr.bf16.mxu0 0
    %171 = vmatpush1.bf16.msra.mxu0 %v154
    %172 = vmatprep.subr.bf16.mxu0 0
    %173 = vmatpush1.bf16.msra.mxu0 %v155
    %174 = vmatprep.subr.bf16.mxu0 0
    %175 = vmatpush1.bf16.msra.mxu0 %v156
    %176 = vmatprep.subr.bf16.mxu0 0
    %177 = vmatpush1.bf16.msra.mxu0 %v157
    %178 = vmatprep.subr.bf16.mxu0 0
    %179 = vmatpush1.bf16.msra.mxu0 %v158
    %180 = vmatprep.subr.bf16.mxu0 0
    %181 = vmatpush1.bf16.msra.mxu0 %v159
    %182 = vmatprep.subr.bf16.mxu0 0
    %183 = vmatpush1.bf16.msra.mxu0 %v160
    %184 = vmatprep.subr.bf16.mxu0 0
    %185 = vmatpush1.bf16.msra.mxu0 %v161
    %186 = vmatprep.subr.bf16.mxu0 0
    %187 = vmatpush1.bf16.msra.mxu0 0
    %188 = vmatprep.subr.bf16.mxu0 0
    %189 = vmatpush1.bf16.msra.mxu0 0
    %190 = vmatprep.subr.bf16.mxu0 0
    %191 = vmatpush1.bf16.msra.mxu0 0
    %192 = vmatprep.subr.bf16.mxu0 0
    %193 = vmatpush1.bf16.msra.mxu0 0
    %194 = vmatprep.subr.bf16.mxu0 0
    %195 = vmatpush1.bf16.msra.mxu0 0
    %196 = vmatprep.subr.bf16.mxu0 0
    %197 = vmatpush1.bf16.msra.mxu0 0
    %198 = vmatprep.subr.bf16.mxu0 0
    %199 = vmatpush1.bf16.msra.mxu0 0
    %200 = vmatprep.subr.bf16.mxu0 0
    %201 = vmatpush1.bf16.msra.mxu0 0
    %202 = vmatprep.mubr.bf16.mxu0 0
    %203 = vmatmul.mubr.bf16.gmra.mrb[0].mxu0 %v98
    %v204 = vpop.f32.mrb[0].mxu0
    %v205 = vadd.f32 %v120, %v204
    %v206 = vpop.f32.mrb[0].mxu0
    %v207 = vpop.f32.mrb[0].mxu0
    %v208 = vpop.f32.mrb[0].mxu0
    %209 = vdwg.mxu0
    %v210 = vpack.c.bf16 %v205, %v205
    %v211 = vld [vmem:[%s5] sm:$0xf]
    %v212 = vld [vmem:[%s5 + $0x4] sm:$0xf]
    %v213 = vld [vmem:[%s5 + $0x8] sm:$0xf]
    %v214 = vld [vmem:[%s5 + $0xc] sm:$0xf]
    %v215 = vld [vmem:[%s5 + $0x10] sm:$0xf]
    %v216 = vld [vmem:[%s5 + $0x14] sm:$0xf]
    %v217 = vld [vmem:[%s5 + $0x18] sm:$0xf]
    %v218 = vld [vmem:[%s5 + $0x1c] sm:$0xf]
    %v219 = vld [vmem:[%s6] sm:$0x1]
    %v221 = vlaneseq
    %v222 = vshrl.u32 %v221, 7
    %v223 = vsub.s32 0, %v222
    %v224 = vrot.slane %v219, %v223
    %v234 = vunpack.c.l.b16 %v211
    %v235 = vunpack.c.l.b16 %v212
    %v236 = vunpack.c.l.b16 %v213
    %v237 = vunpack.c.l.b16 %v214
    %v238 = vunpack.c.l.b16 %v215
    %v239 = vunpack.c.l.b16 %v216
    %v240 = vunpack.c.l.b16 %v217
    %v241 = vunpack.c.l.b16 %v218
    %v242 = vpack.c.b16 %v235, %v234
    %v243 = vpack.c.b16 %v237, %v236
    %v244 = vpack.c.b16 %v239, %v238
    %v245 = vpack.c.b16 %v241, %v240
    %vm250 = vcmask 523264
    %v252 = vsel %vm250, %v210, 0
    %254 = vmatprep.subr.bf16.mxu0 0
    %255 = vmatpush1.bf16.msra.mxu0 %v242
    %256 = vmatprep.subr.bf16.mxu0 0
    %257 = vmatpush1.bf16.msra.mxu0 %v243
    %258 = vmatprep.subr.bf16.mxu0 0
    %259 = vmatpush1.bf16.msra.mxu0 %v244
    %260 = vmatprep.subr.bf16.mxu0 0
    %261 = vmatpush1.bf16.msra.mxu0 %v245
    %262 = vmatprep.subr.bf16.mxu0 0
    %263 = vmatpush1.bf16.msra.mxu0 0
    %264 = vmatprep.subr.bf16.mxu0 0
    %265 = vmatpush1.bf16.msra.mxu0 0
    %266 = vmatprep.subr.bf16.mxu0 0
    %267 = vmatpush1.bf16.msra.mxu0 0
    %268 = vmatprep.subr.bf16.mxu0 0
    %269 = vmatpush1.bf16.msra.mxu0 0
    %270 = vmatprep.subr.bf16.mxu0 0
    %271 = vmatpush1.bf16.msra.mxu0 0
    %272 = vmatprep.subr.bf16.mxu0 0
    %273 = vmatpush1.bf16.msra.mxu0 0
    %274 = vmatprep.subr.bf16.mxu0 0
    %275 = vmatpush1.bf16.msra.mxu0 0
    %276 = vmatprep.subr.bf16.mxu0 0
    %277 = vmatpush1.bf16.msra.mxu0 0
    %278 = vmatprep.subr.bf16.mxu0 0
    %279 = vmatpush1.bf16.msra.mxu0 0
    %280 = vmatprep.subr.bf16.mxu0 0
    %281 = vmatpush1.bf16.msra.mxu0 0
    %282 = vmatprep.subr.bf16.mxu0 0
    %283 = vmatpush1.bf16.msra.mxu0 0
    %284 = vmatprep.subr.bf16.mxu0 0
    %285 = vmatpush1.bf16.msra.mxu0 0
    %286 = vmatprep.mubr.bf16.mxu0 0
    %287 = vmatmul.mubr.bf16.gmra.mrb[0].mxu0 %v252
    %v288 = vpop.f32.mrb[0].mxu0
    %v289 = vadd.f32 %v224, %v288
    %v290 = vpop.f32.mrb[0].mxu0
    %v291 = vpop.f32.mrb[0].mxu0
    %v292 = vpop.f32.mrb[0].mxu0
    %293 = vdwg.mxu0
    %vm294 = vcmask 80896
    %295 = vst.msk [vmem:[#allocation2] sm:$0xff] %vm294, %v289
    // Predicated region
    $region30: #{tpu_custom_call.1} parent=1 // pred_check
      _
    $region31: #{tpu_custom_call.1} parent=1 // pred_check_branch
      %297 = sbr.rel (0) target = $region33
    $region32: #{tpu_custom_call.1} parent=1 // pred_region
      %s299 = ssub.s32 128, 128
      %300 = vsyncadd [#allocation3], %s299
      %s302 = sshll.u32 [#allocation2], 4
      %s303 = int_to_ptr.vmem [resolvable:$true] %s302
      %305 = dma.vmem_to_hbm [thread:$0]  %s303, 128, %s7, [#allocation3]
    $region33: #{tpu_custom_call.1} parent=1 // pred_fallthru
      _
    // Predicated region
    $region34: #{tpu_custom_call.1} parent=1 // pred_check
      _
    $region35: #{tpu_custom_call.1} parent=1 // pred_check_branch
      %307 = sbr.rel (0) target = $region37
    $region36: #{tpu_custom_call.1} parent=1 // pred_region
      %308 = dma.done [#allocation3], 128
    $region37: #{tpu_custom_call.1} parent=1 // pred_fallthru
      _
    %309 = vsyncpa [#allocation3], 1

</llo_original>
